<compile_context>
chip_gen: v5e
topology: v5e:2x2
jax: 0.10.0
libtpu: 0.0.40
codegen_flags: <defaults>
</compile_context>

<pallas_src>
import functools

import jax
import jax.numpy as jnp
from jax.experimental import pallas as pl
from jax.experimental.pallas import tpu as pltpu


_MIB = 1024 * 1024
# Total in-flight block VMEM budget (double-buffered input + output blocks).
# 20 MiB + 8 MiB headroom fits every generation's per-core VMEM (v7x: 64 MiB
# physical, v5e/v6e: 128 MiB physical) and we pass an explicit
# vmem_limit_bytes so the scoped defaults (16/32 MiB) never bite.
_BLOCK_VMEM_BUDGET = 20 * _MIB
_VMEM_HEADROOM = 8 * _MIB


# --------------------------------------------------------------------------
# tiling helpers
# --------------------------------------------------------------------------
def _round_up(x, m):
    return ((x + m - 1) // m) * m


def _min_sublane(dtype):
    # Sub-32-bit dtypes pack along sublanes: f32 -> 8, bf16 -> 16, int8 -> 32.
    return 8 * max(1, 4 // jnp.dtype(dtype).itemsize)


def _tiled_view(out_nc, h, w):
    """Fold (out_nc, H, W) into a lane-dense (rows, cols) 2-D slab."""
    t = out_nc * h * w
    if t % 128 == 0:
        return t // 128, 128            # fully (8,128)-aligned tiles
    # Fallback for unaligned sizes: keep the natural minor dim as the lane
    # axis (block lane dim == full array dim is always legal).  Remainder
    # lanes are masked on store -- far cheaper than one giant unpipelined
    # block or an extra HBM padding pass.
    return out_nc * h, w


def _pick_row_chunk(rows, sub, bytes_per_row, other_steps):
    """Rows-per-block S for a (..., S, cols) tile.

    `bytes_per_row` is the *padded* VMEM bytes contributed per row by one
    pipeline slot (input block + output block); Pallas double-buffers, so the
    in-flight footprint is 2 * S * bytes_per_row.
    """
    if rows <= sub:
        return rows                                 # full extent: always legal
    cap = _BLOCK_VMEM_BUDGET // (2 * bytes_per_row)
    s = max(sub, (cap // sub) * sub)                 # multiple of min sublane tile
    s = min(s, _round_up(rows, sub))
    # Guarantee >= 2 total grid steps so v7x's second TensorCore gets work.
    if other_steps * pl.cdiv(rows, s) < 2:
        s = max(sub, _round_up(pl.cdiv(rows, 2), sub))
    # Prefer an exact divisor of rows (fully unmasked stores) when available;
    # this only ever shrinks s, so the >=2-step guarantee is preserved.
    if rows % sub == 0:
        units = rows // sub
        d = min(s // sub, units)
        while units % d != 0:
            d -= 1
        s = d * sub
    return min(s, rows)


def _vmem_limit(s_rows, sub, bytes_per_row):
    footprint = 2 * _round_up(s_rows, sub) * bytes_per_row   # double-buffered
    return max(16 * _MIB, min(footprint + _VMEM_HEADROOM, 48 * _MIB))


# --------------------------------------------------------------------------
# forward (rev=False): mean over channel-groups
# --------------------------------------------------------------------------
def _cs_forward_kernel(x_ref, o_ref, *, inv_groups):
    # x_ref: (1, groups, S, cols)   o_ref: (1, 1, S, cols)
    # Group axis is a major dim -> plain VPU adds, f32 accumulation.
    s = jnp.sum(x_ref[...], axis=1, keepdims=True, dtype=jnp.float32)
    o_ref[...] = (s * inv_groups).astype(o_ref.dtype)


def cs_layer_forward(x, out_nc):
    """x: (B, C, H, W) NCHW. Returns (B, out_nc, H, W) = mean over C//out_nc groups."""
    b, c, h, w = x.shape
    assert c % out_nc == 0, "C must be divisible by out_nc"
    groups = c // out_nc
    itemsize = jnp.dtype(x.dtype).itemsize
    sub = _min_sublane(x.dtype)

    rows, cols = _tiled_view(out_nc, h, w)
    x4 = x.reshape(b, groups, rows, cols)            # group-major, lane-dense slab

    cols_pad = _round_up(cols, 128)
    bytes_per_row = (groups + 1) * cols_pad * itemsize   # padded in + out, one slot
    s_rows = _pick_row_chunk(rows, sub, bytes_per_row, b)
    n_chunks = pl.cdiv(rows, s_rows)

    bytes_accessed = (b * c * h * w + b * out_nc * h * w) * itemsize
    flops = b * groups * out_nc * h * w               # the group-sum adds

    out = pl.pallas_call(
        functools.partial(_cs_forward_kernel, inv_groups=1.0 / groups),
        out_shape=jax.ShapeDtypeStruct((b, 1, rows, cols), x.dtype),
        grid=(b, n_chunks),
        in_specs=[pl.BlockSpec((1, groups, s_rows, cols),
                               lambda i, j: (i, 0, j, 0))],
        out_specs=pl.BlockSpec((1, 1, s_rows, cols),
                               lambda i, j: (i, 0, j, 0)),
        compiler_params=pltpu.CompilerParams(
            dimension_semantics=("parallel", "parallel"),
            vmem_limit_bytes=_vmem_limit(s_rows, sub, bytes_per_row)),
        cost_estimate=pl.CostEstimate(flops=flops, transcendentals=0,
                                      bytes_accessed=bytes_accessed),
    )(x4)
    return out.reshape(b, out_nc, h, w)


# --------------------------------------------------------------------------
# reverse (rev=True): channel-wise repeat (torch .repeat(1, times, 1, 1))
# --------------------------------------------------------------------------
def _cs_reverse_kernel(x_ref, o_ref):
    # x_ref: (1, 1, S, cols)   o_ref: (1, times, S, cols)
    # The replication is `times` full-tile stores of the same vregs; the input
    # is read once per grid step (no extra grid axis, no redundant DMAs).
    v = x_ref[0, 0]
    for k in range(o_ref.shape[1]):
        o_ref[0, k] = v


def cs_layer_reverse(x, in_nc):
    """x: (B, out_nc, H, W). Returns (B, in_nc, H, W) with channels tiled."""
    b, out_nc, h, w = x.shape
    assert in_nc % out_nc == 0, "in_nc must be divisible by out_nc"
    times = in_nc // out_nc
    itemsize = jnp.dtype(x.dtype).itemsize
    sub = _min_sublane(x.dtype)

    rows, cols = _tiled_view(out_nc, h, w)
    x4 = x.reshape(b, 1, rows, cols)

    cols_pad = _round_up(cols, 128)
    bytes_per_row = (1 + times) * cols_pad * itemsize     # padded in + out, one slot
    s_rows = _pick_row_chunk(rows, sub, bytes_per_row, b)
    n_chunks = pl.cdiv(rows, s_rows)

    t = out_nc * h * w
    bytes_accessed = (b * t + b * times * t) * itemsize

    out = pl.pallas_call(
        _cs_reverse_kernel,
        out_shape=jax.ShapeDtypeStruct((b, times, rows, cols), x.dtype),
        grid=(b, n_chunks),
        in_specs=[pl.BlockSpec((1, 1, s_rows, cols),
                               lambda i, j: (i, 0, j, 0))],
        out_specs=pl.BlockSpec((1, times, s_rows, cols),
                               lambda i, j: (i, 0, j, 0)),
        compiler_params=pltpu.CompilerParams(
            dimension_semantics=("parallel", "parallel"),
            vmem_limit_bytes=_vmem_limit(s_rows, sub, bytes_per_row)),
        cost_estimate=pl.CostEstimate(flops=0, transcendentals=0,
                                      bytes_accessed=bytes_accessed),
    )(x4)
    return out.reshape(b, in_nc, h, w)


# --------------------------------------------------------------------------
# pure-JAX references (sanity checks)
# --------------------------------------------------------------------------
def _forward_ref(x, out_nc):
    b, c, h, w = x.shape
    return jnp.mean(x.reshape(b, c // out_nc, out_nc, h, w), axis=1)


def _reverse_ref(x, in_nc):
    b, out_nc, h, w = x.shape
    times = in_nc // out_nc
    return jnp.tile(x, (1, times, 1, 1))


if __name__ == "__main__":
    # CSLayer has no learnable parameters; config only.
    cs_opt = {"in_nc": 4, "out_nc": 2}

    key = jax.random.PRNGKey(0)
    k1, k2, k3, k4 = jax.random.split(key, 4)

    # ---- aligned shapes (T % 128 == 0): main (8,128)-tiled path ----
    x = jax.random.normal(k1, (2, cs_opt["in_nc"], 16, 16), dtype=jnp.float32)
    y = cs_layer_forward(x, cs_opt["out_nc"])
    jax.block_until_ready(y)
    assert y.shape == (2, cs_opt["out_nc"], 16, 16)
    assert jnp.allclose(y, _forward_ref(x, cs_opt["out_nc"]), atol=1e-6, rtol=1e-6)

    e = jax.random.normal(k2, (2, cs_opt["out_nc"], 16, 16), dtype=jnp.float32)
    z = cs_layer_reverse(e, cs_opt["in_nc"])
    jax.block_until_ready(z)
    assert z.shape == (2, cs_opt["in_nc"], 16, 16)
    assert jnp.allclose(z, _reverse_ref(e, cs_opt["in_nc"]))

    # ---- unaligned shapes (exercise the masked-lane fallback path) ----
    xu = jax.random.normal(k3, (2, cs_opt["in_nc"], 10, 10), dtype=jnp.float32)
    yu = cs_layer_forward(xu, cs_opt["out_nc"])
    jax.block_until_ready(yu)
    assert jnp.allclose(yu, _forward_ref(xu, cs_opt["out_nc"]), atol=1e-6, rtol=1e-6)

    eu = jax.random.normal(k4, (2, cs_opt["out_nc"], 10, 10), dtype=jnp.float32)
    zu = cs_layer_reverse(eu, cs_opt["in_nc"])
    jax.block_until_ready(zu)
    assert jnp.allclose(zu, _reverse_ref(eu, cs_opt["in_nc"]))

    print("KERNEL_OK")
</pallas_src>

<mosaic_0001>
module attributes {stable_mosaic.version = 11 : i64} {
  func.func @_cs_forward_kernel(%arg0: i32, %arg1: i32, %arg2: memref<1x2x4x128xf32, #tpu.memory_space<vmem>>, %arg3: memref<1x1x4x128xf32, #tpu.memory_space<vmem>>) attributes {dimension_semantics = [#tpu.dimension_semantics<parallel>, #tpu.dimension_semantics<parallel>], iteration_bounds = array<i64: 2, 1>, scalar_prefetch = 0 : i64, scratch_operands = 0 : i64, tpu.core_type = #tpu.core_type<tc>, window_params = [{transform_indices = @transform_0, window_bounds = array<i64: 1, 2, 4, 128>}, {transform_indices = @transform_1, window_bounds = array<i64: 1, 1, 4, 128>}]} {
    %c0 = arith.constant 0 : index
    %c0_0 = arith.constant 0 : index
    %c0_1 = arith.constant 0 : index
    %c0_2 = arith.constant 0 : index
    %0 = vector.load %arg2[%c0, %c0_0, %c0_1, %c0_2] : memref<1x2x4x128xf32, #tpu.memory_space<vmem>>, vector<1x2x4x128xf32>
    %cst = arith.constant dense<0.000000e+00> : vector<1x4x128xf32>
    %1 = vector.multi_reduction <add>, %0, %cst [1] : vector<1x2x4x128xf32> to vector<1x4x128xf32>
    %2 = vector.shape_cast %1 : vector<1x4x128xf32> to vector<1x1x4x128xf32>
    %cst_3 = arith.constant 5.000000e-01 : f32
    %3 = vector.broadcast %cst_3 : f32 to vector<1x1x4x128xf32>
    %4 = arith.mulf %2, %3 : vector<1x1x4x128xf32>
    %c0_4 = arith.constant 0 : index
    %c0_5 = arith.constant 0 : index
    %c0_6 = arith.constant 0 : index
    %c0_7 = arith.constant 0 : index
    %5 = vector.load %arg3[%c0_4, %c0_5, %c0_6, %c0_7] : memref<1x1x4x128xf32, #tpu.memory_space<vmem>>, vector<1x1x4x128xf32>
    tpu.vector_store %arg3[%c0_4, %c0_5, %c0_6, %c0_7], %4 {strides = array<i32>} : memref<1x1x4x128xf32, #tpu.memory_space<vmem>>, vector<1x1x4x128xf32>,
    return
  }
  func.func @transform_0(%arg0: i32, %arg1: i32) -> (i32, i32, i32, i32) {
    %c0_i32 = arith.constant 0 : i32
    %c0_i32_0 = arith.constant 0 : i32
    %c0_i32_1 = arith.constant 0 : i32
    return %arg0, %c0_i32, %arg1, %c0_i32_0 : i32, i32, i32, i32
  }
  func.func @transform_1(%arg0: i32, %arg1: i32) -> (i32, i32, i32, i32) {
    %c0_i32 = arith.constant 0 : i32
    %c0_i32_0 = arith.constant 0 : i32
    %c0_i32_1 = arith.constant 0 : i32
    return %arg0, %c0_i32, %arg1, %c0_i32_0 : i32, i32, i32, i32
  }
}

</mosaic_0001>

<llo_original>
// kernel: tpu_custom_call.1
$region0: #{tpu_custom_call.1}
  #allocation0 [shape = 'u32[]', space=smem, size = 0x4, offset = 0x4, fixed_abs, tag = 'smem constant byte address 0x4 - core index']
  #allocation1 [shape = 'u32[72,128]{1,0:T(1,128)}', space=vmem, size = 0x9000, scoped, tag = 'internal scratch']
  %s0 = inlined_call_operand.hbm [shape: f32[2,2,4,128], index: 0, kind: input, shape index: {}]
  %s1 = inlined_call_operand.hbm [shape: f32[2,1,4,128], index: 1, kind: output, shape index: {}]
  %s2 = sld [smem:[#allocation0]]
  $region41: #{tpu_custom_call.1} parent=0
    _
  %s4 = ssub.s32 1, %s2
  %s5 = scalar_select 0, %s4, %s2
  $region1: #{tpu_custom_call.1} parent=0
    #allocation2 [shape = 'u8[8192]{0}', space=vmem, size = 0x2000, scoped, tag = 'input window, operand 0']
    #allocation3 [shape = 's32[2]{0}', space=sflag, size = 0x8, scoped, tag = 'scoped memory for tpu_custom_call.1']
    #allocation4 [shape = 's32[2]{0}', space=sflag, size = 0x8, scoped, tag = 'scoped memory for tpu_custom_call.1']
    #allocation5 [shape = 'u8[4096]{0}', space=vmem, size = 0x1000, scoped, tag = 'output window, operand 0']
    %6 = vsyncpa [#allocation3], 0
    %s7 = scalar_lea.sflag [#allocation3], 1
    %8 = vsyncpa %s7, 0
    %9 = vsyncpa [#allocation4], 0
    %s10 = scalar_lea.sflag [#allocation4], 1
    %11 = vsyncpa %s10, 0
    loop: start=0, step=1, limit=4
    $region2: #{tpu_custom_call.1} parent=1 // loop_pre_header
      _
    $region3: #{tpu_custom_call.1} parent=1 // loop_header
      %s13 = sphi 0, %s17
      %p14 = scmp.ge.s32.totalorder %s13, 4
      %s20 = sphi 0, %s32
      %s21 = sphi 0, %s28
      %s22 = sphi 0, %s20
      %s23 = sphi 0, %s21
      %s24 = sphi 0, %s22
      %s25 = sphi 0, %s23
      %s37 = sphi 0, %s39
      %s40 = sphi 0, %s37
      %s41 = sphi 0, %s40
      %s57 = sphi 0, %s41
      %s65 = sphi 0, %s67
      %s68 = sphi 0, %s65
      %s69 = sphi 0, %s68
      %s85 = sphi 0, %s69
    $region4: #{tpu_custom_call.1} parent=1 // loop_header_branch
      %16 = sbr.rel (%p14) target = $region8
    $region5: #{tpu_custom_call.1} parent=1 // loop_body
      %s18 = ssub.s32 %s13, 1
      %s19 = ssub.s32 %s13, 2
      %s26 = sadd.s32 1, %s21
      %p27 = scmp.ge.s32.totalorder %s26, 1
      %s28 = scalar_select %p27, 0, %s26
      %s29 = sadd.s32 1, %s20
      %s30 = scalar_select %p27, %s29, %s20
      %p31 = scmp.ge.s32.totalorder %s30, 2
      %s32 = scalar_select %p31, 0, %s30
      %s33 = ssub.s32 %s20, %s32
      %s34 = ssub.s32 %s21, %s28
      %s35 = sor.u32 %s33, %s34
      %p36 = scmp.eq.s32.totalorder %s35, 0
      %s38 = sadd.s32 %s37, 1
      %s39 = scalar_select %p36, %s37, %s38
      %p42 = pneg %p36
      %p43 = scmp.eq.s32.totalorder %s13, 1
      %p44 = por %p42, %p43
      %p45 = scmp.ne.s32.totalorder %s37, %s40
      %p46 = scmp.eq.s32.totalorder %s13, 0
      %p47 = por %p45, %p46
      %p48 = scmp.ne.s32.totalorder %s37, %s40
      %p49 = scmp.eq.s32.totalorder %s18, 1
      %p50 = por %p48, %p49
      %p51 = scmp.ne.s32.totalorder %s40, %s41
      %p52 = scmp.eq.s32.totalorder %s18, 0
      %p53 = por %p51, %p52
      %p54 = scmp.ne.s32.totalorder %s40, %s41
      %p55 = scmp.eq.s32.totalorder %s19, 1
      %p56 = por %p54, %p55
      %p58 = scmp.ne.s32.totalorder %s41, %s57
      %p59 = scmp.eq.s32.totalorder %s19, 0
      %p60 = por %p58, %p59
      %s61 = ssub.s32 %s20, %s32
      %s62 = ssub.s32 %s21, %s28
      %s63 = sor.u32 %s61, %s62
      %p64 = scmp.eq.s32.totalorder %s63, 0
      %s66 = sadd.s32 %s65, 1
      %s67 = scalar_select %p64, %s65, %s66
      %p70 = pneg %p64
      %p71 = scmp.eq.s32.totalorder %s13, 1
      %p72 = por %p70, %p71
      %p73 = scmp.ne.s32.totalorder %s65, %s68
      %p74 = scmp.eq.s32.totalorder %s13, 0
      %p75 = por %p73, %p74
      %p76 = scmp.ne.s32.totalorder %s65, %s68
      %p77 = scmp.eq.s32.totalorder %s18, 1
      %p78 = por %p76, %p77
      %p79 = scmp.ne.s32.totalorder %s68, %s69
      %p80 = scmp.eq.s32.totalorder %s18, 0
      %p81 = por %p79, %p80
      %p82 = scmp.ne.s32.totalorder %s68, %s69
      %p83 = scmp.eq.s32.totalorder %s19, 1
      %p84 = por %p82, %p83
      %p86 = scmp.ne.s32.totalorder %s69, %s85
      %p87 = scmp.eq.s32.totalorder %s19, 0
      %p88 = por %p86, %p87
      %p89 = scmp.le.s32.totalorder 1, %s13
      %p90 = scmp.lt.s32.totalorder %s13, 3
      %p91 = pnand %p89, %p90
      %p92 = pneg %p91
      // Predicated region
      $region9: #{tpu_custom_call.1} parent=5 // pred_check
        _
      $region10: #{tpu_custom_call.1} parent=5 // pred_check_branch
        %94 = sbr.rel (%p91) target = $region12
      $region11: #{tpu_custom_call.1} parent=5 // pred_region
        %s95 = ssub.s32 %s13, 1
      $region12: #{tpu_custom_call.1} parent=5 // pred_fallthru
        _
      %p96 = scmp.lt.s32.totalorder %s13, 2
      // Predicated region
      $region13: #{tpu_custom_call.1} parent=5 // pred_check
        %p97 = pneg %p96
      $region14: #{tpu_custom_call.1} parent=5 // pred_check_branch
        %99 = sbr.rel (%p97) target = $region16
      $region15: #{tpu_custom_call.1} parent=5 // pred_region
        // Predicated region
        $region17: #{tpu_custom_call.1} parent=15 // pred_check
          %p100 = pneg %p47
        $region18: #{tpu_custom_call.1} parent=15 // pred_check_branch
          %102 = sbr.rel (%p100) target = $region20
        $region19: #{tpu_custom_call.1} parent=15 // pred_region
          %s103 = sand.u32 %s37, 1
          %s104 = scalar_lea.sflag [#allocation3], %s103
          %s105 = sand.u32 %s37, 1
          %s106 = smul.addr %s105, 8
          %s107 = scalar_lea.vmem [#allocation2], %s106
          %109 = vsyncadd %s104, 0
          %s110 = smul.addr %s20, 2
          %s111 = sadd.s32 %s21, %s110
          %s112 = smul.addr %s111, 4
          %s113 = scalar_lea.hbm %s0, %s112
          %s114 = sshll.u32 %s113, 4
          %s115 = int_to_ptr.hbm [resolvable:$true] %s114
          %s116 = sshll.u32 %s107, 4
          %s117 = int_to_ptr.vmem [resolvable:$true] %s116
          %122 = dma.hbm_to_vmem [thread:$0]  %s115, 128, %s117, %s104, 64, 64, 4
        $region20: #{tpu_custom_call.1} parent=15 // pred_fallthru
          _
      $region16: #{tpu_custom_call.1} parent=5 // pred_fallthru
        _
      %p123 = scmp.le.s32.totalorder 1, %s13
      %p124 = scmp.lt.s32.totalorder %s13, 3
      %p125 = pnand %p123, %p124
      %p126 = pneg %p125
      // Predicated region
      $region21: #{tpu_custom_call.1} parent=5 // pred_check
        _
      $region22: #{tpu_custom_call.1} parent=5 // pred_check_branch
        %128 = sbr.rel (%p125) target = $region24
      $region23: #{tpu_custom_call.1} parent=5 // pred_region
        %s129 = ssub.s32 %s13, 1
        %s130 = sand.u32 %s40, 1
        %s131 = scalar_lea.sflag [#allocation3], %s130
        %s132 = sand.u32 %s40, 1
        %s133 = smul.addr %s132, 8
        %s134 = scalar_lea.vmem [#allocation2], %s133
        // Predicated region
        $region25: #{tpu_custom_call.1} parent=23 // pred_check
          %p135 = pneg %p53
        $region26: #{tpu_custom_call.1} parent=23 // pred_check_branch
          %137 = sbr.rel (%p135) target = $region28
        $region27: #{tpu_custom_call.1} parent=23 // pred_region
          %139 = dma.done %s131, 128
        $region28: #{tpu_custom_call.1} parent=23 // pred_fallthru
          _
        %s140 = sand.u32 %s40, 1
        %s141 = scalar_lea.sflag [#allocation3], %s140
        %s142 = sand.u32 %s40, 1
        %s143 = smul.addr %s142, 8
        %s144 = scalar_lea.vmem [#allocation2], %s143
        %p145 = pneg %p53
        %p146 = pneg %p50
        %p147 = pneg %p81
        %p148 = pneg %p78
        %s149 = sand.u32 %s68, 1
        %s150 = scalar_lea.sflag [#allocation4], %s149
        %s151 = sand.u32 %s68, 1
        %s152 = smul.addr %s151, 4
        %s153 = scalar_lea.vmem [#allocation5], %s152
        %v154 = vld [vmem:[%s134] sm:$0xf]
        %v155 = vld [vmem:[%s134 + $0x4] sm:$0xf]
        %vm156 = vcmask 1043456
        %v157 = vsel %vm156, %v154, 0.0
        %v158 = vsel %vm156, %v155, 0.0
        %v159 = vadd.f32 %v157, %v158
        %v160 = vmul.f32 %v159, 0.5
        %161 = vst [vmem:[%s153] sm:$0xf] %v160
        %s162 = sand.u32 %s68, 1
        %s163 = scalar_lea.sflag [#allocation4], %s162
        %s164 = sand.u32 %s68, 1
        %s165 = smul.addr %s164, 4
        %s166 = scalar_lea.vmem [#allocation5], %s165
        // Predicated region
        $region29: #{tpu_custom_call.1} parent=23 // pred_check
          %p167 = pneg %p78
        $region30: #{tpu_custom_call.1} parent=23 // pred_check_branch
          %169 = sbr.rel (%p167) target = $region32
        $region31: #{tpu_custom_call.1} parent=23 // pred_region
          %171 = vsyncadd %s163, 0
          %s172 = sadd.s32 %s23, %s22
          %s173 = smul.addr %s172, 4
          %s174 = scalar_lea.hbm %s1, %s173
          %s176 = sshll.u32 %s166, 4
          %s177 = int_to_ptr.vmem [resolvable:$true] %s176
          %s178 = sshll.u32 %s174, 4
          %s179 = int_to_ptr.hbm [resolvable:$true] %s178
          %181 = dma.vmem_to_hbm [thread:$0]  %s177, 64, %s179, %s163
        $region32: #{tpu_custom_call.1} parent=23 // pred_fallthru
          _
      $region24: #{tpu_custom_call.1} parent=5 // pred_fallthru
        _
      %p182 = scmp.le.s32.totalorder 2, %s13
      // Predicated region
      $region33: #{tpu_custom_call.1} parent=5 // pred_check
        %p183 = pneg %p182
      $region34: #{tpu_custom_call.1} parent=5 // pred_check_branch
        %185 = sbr.rel (%p183) target = $region36
      $region35: #{tpu_custom_call.1} parent=5 // pred_region
        %s186 = ssub.s32 %s13, 2
        // Predicated region
        $region37: #{tpu_custom_call.1} parent=35 // pred_check
          %p187 = pneg %p84
        $region38: #{tpu_custom_call.1} parent=35 // pred_check_branch
          %189 = sbr.rel (%p187) target = $region40
        $region39: #{tpu_custom_call.1} parent=35 // pred_region
          %s190 = sand.u32 %s69, 1
          %s191 = scalar_lea.sflag [#allocation4], %s190
          %s192 = sand.u32 %s69, 1
          %s193 = smul.addr %s192, 4
          %s194 = scalar_lea.vmem [#allocation5], %s193
          %196 = dma.done %s191, 64
        $region40: #{tpu_custom_call.1} parent=35 // pred_fallthru
          _
      $region36: #{tpu_custom_call.1} parent=5 // pred_fallthru
        _
    $region6: #{tpu_custom_call.1} parent=1 // loop_footer
      %s17 = sadd.s32 1, %s13
    $region7: #{tpu_custom_call.1} parent=1 // loop_footer_branch
      %12 = sbr.rel target = $region3
    $region8: #{tpu_custom_call.1} parent=1 // loop_exit
      _
    %197 = vsyncpa [#allocation3], 1
    %s198 = scalar_lea.sflag [#allocation3], 1
    %199 = vsyncpa %s198, 1
    %200 = vsyncpa [#allocation4], 1
    %s201 = scalar_lea.sflag [#allocation4], 1
    %202 = vsyncpa %s201, 1

</llo_original>
